<compile_context>
chip_gen: v5e
topology: v5e:2x2
jax: 0.10.0
libtpu: 0.0.40
codegen_flags: <defaults>
</compile_context>

<pallas_src>
import jax
import jax.numpy as jnp
import numpy as np
from jax.experimental import pallas as pl
from jax.experimental.pallas import tpu as pltpu


def _channel_gate_kernel(w1t_ref, b1_ref, w2t_ref, b2_ref, x_ref, o_ref):
    # w1t_ref: (C, Hp), b1_ref: (1, Hp), w2t_ref: (Hp, C), b2_ref: (1, C)
    # x_ref / o_ref: (Nb, C, HW) VMEM (lane-dense last dim)
    x = x_ref[...]                                     # native dtype, one load

    # --- global average / max pooling over the lane-dense spatial axis ---
    # Mean accumulates in f32 (exact for f32 inputs); max is exact as-is.
    avg = jnp.mean(x, axis=-1, dtype=jnp.float32)      # (Nb, C)
    mx = jnp.max(x, axis=-1).astype(jnp.float32)       # (Nb, C)

    # --- shared MLP on the MXU: one matmul pair covers both pools ---
    p = jnp.concatenate([avg, mx], axis=0)             # (2*Nb, C)
    h = jnp.dot(p, w1t_ref[...],
                preferred_element_type=jnp.float32,
                precision=jax.lax.Precision.HIGHEST) + b1_ref[...]
    h = jnp.maximum(h, 0.0)                            # ReLU
    y = jnp.dot(h, w2t_ref[...],
                preferred_element_type=jnp.float32,
                precision=jax.lax.Precision.HIGHEST) + b2_ref[...]
    nb = x.shape[0]
    att = y[:nb] + y[nb:]                              # (Nb, C)
    scale = jax.nn.sigmoid(att)                        # (Nb, C), f32

    # --- gate multiply in native dtype (no f32 copy of the whole block) ---
    o_ref[...] = x * scale.astype(o_ref.dtype)[:, :, None]


def _plan(n, c, hw, itemsize, weight_bytes):
    """Pick the batch block size and an explicit scoped-VMEM limit."""
    per_img = max(c * hw * itemsize, 1)

    try:
        info = pltpu.get_tpu_info()
        vmem_phys = int(getattr(info, "vmem_capacity_bytes", 0)) or (64 << 20)
    except Exception:
        vmem_phys = 64 << 20            # conservative: v7x per-TensorCore VMEM

    # In/out blocks are each double-buffered -> 4 live slabs + weights + margin.
    usable = max(per_img * 4, int(vmem_phys * 3 // 4))
    slab_budget = max(per_img, (usable - 2 * weight_bytes - (4 << 20)) // 4)

    # Keep >= ~8 grid steps when the batch allows: pipelines DMA under compute
    # and gives the "parallel" axis work to shard across TensorCores (v7x).
    bn_vmem = max(1, slab_budget // per_img)
    bn_steps = max(1, -(-n // 8))
    bn = int(max(1, min(n, bn_vmem, bn_steps)))
    while n % bn:                       # uniform blocks
        bn -= 1

    # Explicit scoped-VMEM limit: what we actually use, with headroom, capped
    # below physical VMEM.
    need = 4 * bn * per_img + 2 * weight_bytes + (4 << 20)
    vmem_limit = int(min(max(need, 32 << 20), vmem_phys * 9 // 10))
    return bn, vmem_limit


def channel_gate(x, w1, b1, w2, b2):
    """x: (N, C, H, W); w1: (Hd, C); b1: (Hd,); w2: (C, Hd); b2: (C,)."""
    N, C, H, W = x.shape
    HW = H * W
    hidden = w1.shape[0]
    # Pad the hidden dim to a sublane multiple; zero pad columns/rows/biases
    # contribute exactly 0 through ReLU, so results are unchanged.
    hp = max(8, -(-hidden // 8) * 8)

    # Lane-dense flattening of the spatial axes (free view). Full lane
    # utilization requires HW % 128 == 0; otherwise stores are masked
    # (still correct, just not peak store bandwidth).
    x3 = x.reshape(N, C, HW)

    w1t = jnp.zeros((C, hp), jnp.float32).at[:, :hidden].set(
        jnp.transpose(w1).astype(jnp.float32))
    b1p = jnp.zeros((1, hp), jnp.float32).at[:, :hidden].set(
        b1.reshape(1, hidden).astype(jnp.float32))
    w2t = jnp.zeros((hp, C), jnp.float32).at[:hidden, :].set(
        jnp.transpose(w2).astype(jnp.float32))
    b2p = b2.reshape(1, C).astype(jnp.float32)

    weight_bytes = 4 * (C * hp + hp + hp * C + C)
    block_n, vmem_limit = _plan(N, C, HW, x.dtype.itemsize, weight_bytes)
    grid = (N // block_n,)

    cost = pl.CostEstimate(
        flops=5 * N * C * HW + 8 * N * C * hp,
        transcendentals=2 * N * C,
        bytes_accessed=2 * N * C * HW * x.dtype.itemsize + weight_bytes,
    )

    kernel = pl.pallas_call(
        _channel_gate_kernel,
        out_shape=jax.ShapeDtypeStruct((N, C, HW), x.dtype),
        grid_spec=pltpu.PrefetchScalarGridSpec(
            num_scalar_prefetch=0,
            grid=grid,
            in_specs=[
                pl.BlockSpec((C, hp), lambda n: (0, 0)),            # W1^T (padded)
                pl.BlockSpec((1, hp), lambda n: (0, 0)),            # b1
                pl.BlockSpec((hp, C), lambda n: (0, 0)),            # W2^T (padded)
                pl.BlockSpec((1, C), lambda n: (0, 0)),             # b2
                pl.BlockSpec((block_n, C, HW), lambda n: (n, 0, 0)),
            ],
            out_specs=pl.BlockSpec((block_n, C, HW), lambda n: (n, 0, 0)),
        ),
        compiler_params=pltpu.CompilerParams(
            dimension_semantics=("parallel",),
            vmem_limit_bytes=vmem_limit,
        ),
        cost_estimate=cost,
    )
    out3 = kernel(w1t, b1p, w2t, b2p, x3)
    return out3.reshape(N, C, H, W)


def _reference(x, w1, b1, w2, b2):
    """Pure-JAX reference of ChannelGate forward (pool_types=['avg','max'])."""
    hi = jax.lax.Precision.HIGHEST
    avg = jnp.mean(x, axis=(2, 3))
    mx = jnp.max(x, axis=(2, 3))

    def mlp(p):
        h = jnp.maximum(jnp.dot(p, w1.T, precision=hi) + b1, 0.0)
        return jnp.dot(h, w2.T, precision=hi) + b2

    att = mlp(avg) + mlp(mx)
    scale = jax.nn.sigmoid(att)
    return x * scale[:, :, None, None]


if __name__ == "__main__":
    key = jax.random.PRNGKey(0)
    kx, k1, k2, k3, k4 = jax.random.split(key, 5)

    # gate_channel must be >= reduction_ratio for the MLP to be non-degenerate.
    N, C, H, W = 2, 32, 16, 16
    reduction = 16
    hidden = C // reduction                                   # = 2
    x = jax.random.normal(kx, (N, C, H, W), dtype=jnp.float32)

    # nn.Linear default init: U(-1/sqrt(fan_in), 1/sqrt(fan_in)) for W and b.
    lim1 = 1.0 / np.sqrt(C)
    w1 = jax.random.uniform(k1, (hidden, C), jnp.float32, minval=-lim1, maxval=lim1)
    b1 = jax.random.uniform(k2, (hidden,), jnp.float32, minval=-lim1, maxval=lim1)
    lim2 = 1.0 / np.sqrt(hidden)
    w2 = jax.random.uniform(k3, (C, hidden), jnp.float32, minval=-lim2, maxval=lim2)
    b2 = jax.random.uniform(k4, (C,), jnp.float32, minval=-lim2, maxval=lim2)

    out = channel_gate(x, w1, b1, w2, b2)
    out = jax.block_until_ready(out)

    ref = _reference(x, w1, b1, w2, b2)
    assert out.shape == x.shape and out.dtype == x.dtype
    assert np.allclose(np.asarray(out), np.asarray(ref), atol=1e-5, rtol=1e-4)
    print("KERNEL_OK")
</pallas_src>

<mosaic_0001>
module attributes {stable_mosaic.version = 11 : i64} {
  func.func @_channel_gate_kernel(%arg0: i32, %arg1: memref<32x8xf32, #tpu.memory_space<vmem>>, %arg2: memref<1x8xf32, #tpu.memory_space<vmem>>, %arg3: memref<8x32xf32, #tpu.memory_space<vmem>>, %arg4: memref<1x32xf32, #tpu.memory_space<vmem>>, %arg5: memref<1x32x256xf32, #tpu.memory_space<vmem>>, %arg6: memref<1x32x256xf32, #tpu.memory_space<vmem>>) attributes {dimension_semantics = [#tpu.dimension_semantics<parallel>], iteration_bounds = array<i64: 2>, scalar_prefetch = 0 : i64, scratch_operands = 0 : i64, tpu.core_type = #tpu.core_type<tc>, window_params = [{pipeline_mode = #tpu.pipeline_mode<synchronous>, transform_indices = @transform_0, window_bounds = array<i64: 32, 8>}, {pipeline_mode = #tpu.pipeline_mode<synchronous>, transform_indices = @transform_1, window_bounds = array<i64: 1, 8>}, {pipeline_mode = #tpu.pipeline_mode<synchronous>, transform_indices = @transform_2, window_bounds = array<i64: 8, 32>}, {pipeline_mode = #tpu.pipeline_mode<synchronous>, transform_indices = @transform_3, window_bounds = array<i64: 1, 32>}, {transform_indices = @transform_4, window_bounds = array<i64: 1, 32, 256>}, {transform_indices = @transform_5, window_bounds = array<i64: 1, 32, 256>}]} {
    %c0 = arith.constant 0 : index
    %c0_0 = arith.constant 0 : index
    %c0_1 = arith.constant 0 : index
    %0 = vector.load %arg5[%c0, %c0_0, %c0_1] : memref<1x32x256xf32, #tpu.memory_space<vmem>>, vector<1x32x256xf32>
    %cst = arith.constant dense<0.000000e+00> : vector<1x32xf32>
    %1 = vector.multi_reduction <add>, %0, %cst [2] : vector<1x32x256xf32> to vector<1x32xf32>
    %cst_2 = arith.constant 2.560000e+02 : f32
    %2 = vector.broadcast %cst_2 : f32 to vector<1x32xf32>
    %3 = arith.divf %1, %2 : vector<1x32xf32>
    %cst_3 = arith.constant dense<0xFF800000> : vector<1x32xf32>
    %4 = vector.multi_reduction <maximumf>, %0, %cst_3 [2] : vector<1x32x256xf32> to vector<1x32xf32>
    %5 = tpu.concatenate %3, %4 in 0 : vector<1x32xf32>, vector<1x32xf32> -> vector<2x32xf32>
    %c0_4 = arith.constant 0 : index
    %c0_5 = arith.constant 0 : index
    %6 = vector.load %arg1[%c0_4, %c0_5] : memref<32x8xf32, #tpu.memory_space<vmem>>, vector<32x8xf32>
    %cst_6 = arith.constant dense<0.000000e+00> : vector<2x8xf32>
    %7 = tpu.matmul %5, %6, %cst_6 {dimension_numbers = #tpu.dot_dimension_numbers<[1], [0], [0], [1], [0, 0, 1, 1], [], []>, precision = #tpu.contract_precision<fp32>} : vector<2x32xf32>, vector<32x8xf32>, vector<2x8xf32> -> vector<2x8xf32>
    %c0_7 = arith.constant 0 : index
    %c0_8 = arith.constant 0 : index
    %8 = vector.load %arg2[%c0_7, %c0_8] : memref<1x8xf32, #tpu.memory_space<vmem>>, vector<1x8xf32>
    %9 = vector.broadcast %8 : vector<1x8xf32> to vector<2x8xf32>
    %10 = arith.addf %7, %9 : vector<2x8xf32>
    %cst_9 = arith.constant 0.000000e+00 : f32
    %11 = vector.broadcast %cst_9 : f32 to vector<2x8xf32>
    %12 = arith.maximumf %10, %11 : vector<2x8xf32>
    %c0_10 = arith.constant 0 : index
    %c0_11 = arith.constant 0 : index
    %13 = vector.load %arg3[%c0_10, %c0_11] : memref<8x32xf32, #tpu.memory_space<vmem>>, vector<8x32xf32>
    %cst_12 = arith.constant dense<0.000000e+00> : vector<2x32xf32>
    %14 = tpu.matmul %12, %13, %cst_12 {dimension_numbers = #tpu.dot_dimension_numbers<[1], [0], [0], [1], [0, 0, 1, 1], [], []>, precision = #tpu.contract_precision<fp32>} : vector<2x8xf32>, vector<8x32xf32>, vector<2x32xf32> -> vector<2x32xf32>
    %c0_13 = arith.constant 0 : index
    %c0_14 = arith.constant 0 : index
    %15 = vector.load %arg4[%c0_13, %c0_14] : memref<1x32xf32, #tpu.memory_space<vmem>>, vector<1x32xf32>
    %16 = vector.broadcast %15 : vector<1x32xf32> to vector<2x32xf32>
    %17 = arith.addf %14, %16 : vector<2x32xf32>
    %18 = vector.extract_strided_slice %17 {offsets = [0, 0], sizes = [1, 32], strides = [1, 1]} : vector<2x32xf32> to vector<1x32xf32>
    %19 = vector.extract_strided_slice %17 {offsets = [1, 0], sizes = [1, 32], strides = [1, 1]} : vector<2x32xf32> to vector<1x32xf32>
    %20 = arith.addf %18, %19 : vector<1x32xf32>
    %21 = arith.negf %20 : vector<1x32xf32>
    %22 = math.exp %21 : vector<1x32xf32>
    %cst_15 = arith.constant 1.000000e+00 : f32
    %23 = vector.broadcast %cst_15 : f32 to vector<1x32xf32>
    %24 = arith.addf %23, %22 : vector<1x32xf32>
    %25 = arith.divf %23, %24 : vector<1x32xf32>
    %26 = vector.shape_cast %25 : vector<1x32xf32> to vector<1x32x1xf32>
    %27 = vector.broadcast %26 : vector<1x32x1xf32> to vector<1x32x256xf32>
    %28 = arith.mulf %0, %27 : vector<1x32x256xf32>
    %c0_16 = arith.constant 0 : index
    %c0_17 = arith.constant 0 : index
    %c0_18 = arith.constant 0 : index
    %29 = vector.load %arg6[%c0_16, %c0_17, %c0_18] : memref<1x32x256xf32, #tpu.memory_space<vmem>>, vector<1x32x256xf32>
    tpu.vector_store %arg6[%c0_16, %c0_17, %c0_18], %28 {strides = array<i32>} : memref<1x32x256xf32, #tpu.memory_space<vmem>>, vector<1x32x256xf32>,
    return
  }
  func.func @transform_0(%arg0: i32) -> (i32, i32) {
    %c0_i32 = arith.constant 0 : i32
    %c0_i32_0 = arith.constant 0 : i32
    %c0_i32_1 = arith.constant 0 : i32
    return %c0_i32, %c0_i32_0 : i32, i32
  }
  func.func @transform_1(%arg0: i32) -> (i32, i32) {
    %c0_i32 = arith.constant 0 : i32
    %c0_i32_0 = arith.constant 0 : i32
    %c0_i32_1 = arith.constant 0 : i32
    return %c0_i32, %c0_i32_0 : i32, i32
  }
  func.func @transform_2(%arg0: i32) -> (i32, i32) {
    %c0_i32 = arith.constant 0 : i32
    %c0_i32_0 = arith.constant 0 : i32
    %c0_i32_1 = arith.constant 0 : i32
    return %c0_i32, %c0_i32_0 : i32, i32
  }
  func.func @transform_3(%arg0: i32) -> (i32, i32) {
    %c0_i32 = arith.constant 0 : i32
    %c0_i32_0 = arith.constant 0 : i32
    %c0_i32_1 = arith.constant 0 : i32
    return %c0_i32, %c0_i32_0 : i32, i32
  }
  func.func @transform_4(%arg0: i32) -> (i32, i32, i32) {
    %c0_i32 = arith.constant 0 : i32
    %c0_i32_0 = arith.constant 0 : i32
    %c0_i32_1 = arith.constant 0 : i32
    return %arg0, %c0_i32, %c0_i32_0 : i32, i32, i32
  }
  func.func @transform_5(%arg0: i32) -> (i32, i32, i32) {
    %c0_i32 = arith.constant 0 : i32
    %c0_i32_0 = arith.constant 0 : i32
    %c0_i32_1 = arith.constant 0 : i32
    return %arg0, %c0_i32, %c0_i32_0 : i32, i32, i32
  }
}

</mosaic_0001>

<llo_original>
// kernel: tpu_custom_call.1
$region0: #{tpu_custom_call.1}
  #allocation0 [shape = 'u32[]', space=smem, size = 0x4, offset = 0x4, fixed_abs, tag = 'smem constant byte address 0x4 - core index']
  #allocation1 [shape = 'u32[72,128]{1,0:T(1,128)}', space=vmem, size = 0x9000, scoped, tag = 'internal scratch']
  %s0 = inlined_call_operand.vmem [shape: f32[32,8], index: 0, kind: input, shape index: {}]
  %s1 = inlined_call_operand.vmem [shape: f32[1,8], index: 1, kind: input, shape index: {}]
  %s2 = inlined_call_operand.vmem [shape: f32[8,32], index: 2, kind: input, shape index: {}]
  %s3 = inlined_call_operand.vmem [shape: f32[1,32], index: 3, kind: input, shape index: {}]
  %s4 = inlined_call_operand.hbm [shape: f32[2,32,256], index: 4, kind: input, shape index: {}]
  %s5 = inlined_call_operand.hbm [shape: f32[2,32,256], index: 5, kind: output, shape index: {}]
  %s6 = sld [smem:[#allocation0]]
  $region57: #{tpu_custom_call.1} parent=0
    _
  %s8 = ssub.s32 1, %s6
  %s9 = scalar_select 0, %s8, %s6
  $region1: #{tpu_custom_call.1} parent=0
    #allocation2 [shape = 'u8[65536]{0}', space=vmem, size = 0x10000, scoped, tag = 'input window, operand 4']
    #allocation3 [shape = 's32[2]{0}', space=sflag, size = 0x8, scoped, tag = 'scoped memory for tpu_custom_call.1']
    #allocation4 [shape = 's32[2]{0}', space=sflag, size = 0x8, scoped, tag = 'scoped memory for tpu_custom_call.1']
    #allocation5 [shape = 'u8[65536]{0}', space=vmem, size = 0x10000, scoped, tag = 'output window, operand 0']
    %10 = vsyncpa [#allocation3], 0
    %s11 = scalar_lea.sflag [#allocation3], 1
    %12 = vsyncpa %s11, 0
    %13 = vsyncpa [#allocation4], 0
    %s14 = scalar_lea.sflag [#allocation4], 1
    %15 = vsyncpa %s14, 0
    loop: start=0, step=1, limit=4
    $region2: #{tpu_custom_call.1} parent=1 // loop_pre_header
      _
    $region3: #{tpu_custom_call.1} parent=1 // loop_header
      %s17 = sphi 0, %s21
      %p18 = scmp.ge.s32.totalorder %s17, 4
      %s25 = sphi 0, %s25
      %s27 = sphi 0, %s25
      %s28 = sphi 0, %s27
      %s42 = sphi 0, %s28
      %s46 = sphi 0, %s46
      %s48 = sphi 0, %s46
      %s49 = sphi 0, %s48
      %s63 = sphi 0, %s49
      %s67 = sphi 0, %s67
      %s69 = sphi 0, %s67
      %s70 = sphi 0, %s69
      %s84 = sphi 0, %s70
      %s88 = sphi 0, %s88
      %s90 = sphi 0, %s88
      %s91 = sphi 0, %s90
      %s105 = sphi 0, %s91
      %s111 = sphi 0, %s113
      %s114 = sphi 0, %s111
      %s115 = sphi 0, %s114
      %s131 = sphi 0, %s115
      %s137 = sphi 0, %s139
      %s140 = sphi 0, %s137
      %s141 = sphi 0, %s140
      %s157 = sphi 0, %s141
    $region4: #{tpu_custom_call.1} parent=1 // loop_header_branch
      %20 = sbr.rel (%p18) target = $region8
    $region5: #{tpu_custom_call.1} parent=1 // loop_body
      %s22 = ssub.s32 %s17, 1
      %s23 = ssub.s32 %s17, 2
      %s24 = sadd.s32 %s17, 1
      %s26 = sadd.s32 %s25, 1
      %p29 = scmp.eq.s32.totalorder %s17, 1
      %p30 = scmp.ne.s32.totalorder %s25, %s27
      %p31 = scmp.eq.s32.totalorder %s17, 0
      %p32 = por %p30, %p31
      %p33 = scmp.ne.s32.totalorder %s25, %s27
      %p34 = scmp.eq.s32.totalorder %s22, 1
      %p35 = por %p33, %p34
      %p36 = scmp.ne.s32.totalorder %s27, %s28
      %p37 = scmp.eq.s32.totalorder %s22, 0
      %p38 = por %p36, %p37
      %p39 = scmp.ne.s32.totalorder %s27, %s28
      %p40 = scmp.eq.s32.totalorder %s23, 1
      %p41 = por %p39, %p40
      %p43 = scmp.ne.s32.totalorder %s28, %s42
      %p44 = scmp.eq.s32.totalorder %s23, 0
      %p45 = por %p43, %p44
      %s47 = sadd.s32 %s46, 1
      %p50 = scmp.eq.s32.totalorder %s17, 1
      %p51 = scmp.ne.s32.totalorder %s46, %s48
      %p52 = scmp.eq.s32.totalorder %s17, 0
      %p53 = por %p51, %p52
      %p54 = scmp.ne.s32.totalorder %s46, %s48
      %p55 = scmp.eq.s32.totalorder %s22, 1
      %p56 = por %p54, %p55
      %p57 = scmp.ne.s32.totalorder %s48, %s49
      %p58 = scmp.eq.s32.totalorder %s22, 0
      %p59 = por %p57, %p58
      %p60 = scmp.ne.s32.totalorder %s48, %s49
      %p61 = scmp.eq.s32.totalorder %s23, 1
      %p62 = por %p60, %p61
      %p64 = scmp.ne.s32.totalorder %s49, %s63
      %p65 = scmp.eq.s32.totalorder %s23, 0
      %p66 = por %p64, %p65
      %s68 = sadd.s32 %s67, 1
      %p71 = scmp.eq.s32.totalorder %s17, 1
      %p72 = scmp.ne.s32.totalorder %s67, %s69
      %p73 = scmp.eq.s32.totalorder %s17, 0
      %p74 = por %p72, %p73
      %p75 = scmp.ne.s32.totalorder %s67, %s69
      %p76 = scmp.eq.s32.totalorder %s22, 1
      %p77 = por %p75, %p76
      %p78 = scmp.ne.s32.totalorder %s69, %s70
      %p79 = scmp.eq.s32.totalorder %s22, 0
      %p80 = por %p78, %p79
      %p81 = scmp.ne.s32.totalorder %s69, %s70
      %p82 = scmp.eq.s32.totalorder %s23, 1
      %p83 = por %p81, %p82
      %p85 = scmp.ne.s32.totalorder %s70, %s84
      %p86 = scmp.eq.s32.totalorder %s23, 0
      %p87 = por %p85, %p86
      %s89 = sadd.s32 %s88, 1
      %p92 = scmp.eq.s32.totalorder %s17, 1
      %p93 = scmp.ne.s32.totalorder %s88, %s90
      %p94 = scmp.eq.s32.totalorder %s17, 0
      %p95 = por %p93, %p94
      %p96 = scmp.ne.s32.totalorder %s88, %s90
      %p97 = scmp.eq.s32.totalorder %s22, 1
      %p98 = por %p96, %p97
      %p99 = scmp.ne.s32.totalorder %s90, %s91
      %p100 = scmp.eq.s32.totalorder %s22, 0
      %p101 = por %p99, %p100
      %p102 = scmp.ne.s32.totalorder %s90, %s91
      %p103 = scmp.eq.s32.totalorder %s23, 1
      %p104 = por %p102, %p103
      %p106 = scmp.ne.s32.totalorder %s91, %s105
      %p107 = scmp.eq.s32.totalorder %s23, 0
      %p108 = por %p106, %p107
      %s109 = ssub.s32 %s17, %s24
      %p110 = scmp.eq.s32.totalorder %s109, 0
      %s112 = sadd.s32 %s111, 1
      %s113 = scalar_select %p110, %s111, %s112
      %p116 = pneg %p110
      %p117 = scmp.eq.s32.totalorder %s17, 1
      %p118 = por %p116, %p117
      %p119 = scmp.ne.s32.totalorder %s111, %s114
      %p120 = scmp.eq.s32.totalorder %s17, 0
      %p121 = por %p119, %p120
      %p122 = scmp.ne.s32.totalorder %s111, %s114
      %p123 = scmp.eq.s32.totalorder %s22, 1
      %p124 = por %p122, %p123
      %p125 = scmp.ne.s32.totalorder %s114, %s115
      %p126 = scmp.eq.s32.totalorder %s22, 0
      %p127 = por %p125, %p126
      %p128 = scmp.ne.s32.totalorder %s114, %s115
      %p129 = scmp.eq.s32.totalorder %s23, 1
      %p130 = por %p128, %p129
      %p132 = scmp.ne.s32.totalorder %s115, %s131
      %p133 = scmp.eq.s32.totalorder %s23, 0
      %p134 = por %p132, %p133
      %s135 = ssub.s32 %s17, %s24
      %p136 = scmp.eq.s32.totalorder %s135, 0
      %s138 = sadd.s32 %s137, 1
      %s139 = scalar_select %p136, %s137, %s138
      %p142 = pneg %p136
      %p143 = scmp.eq.s32.totalorder %s17, 1
      %p144 = por %p142, %p143
      %p145 = scmp.ne.s32.totalorder %s137, %s140
      %p146 = scmp.eq.s32.totalorder %s17, 0
      %p147 = por %p145, %p146
      %p148 = scmp.ne.s32.totalorder %s137, %s140
      %p149 = scmp.eq.s32.totalorder %s22, 1
      %p150 = por %p148, %p149
      %p151 = scmp.ne.s32.totalorder %s140, %s141
      %p152 = scmp.eq.s32.totalorder %s22, 0
      %p153 = por %p151, %p152
      %p154 = scmp.ne.s32.totalorder %s140, %s141
      %p155 = scmp.eq.s32.totalorder %s23, 1
      %p156 = por %p154, %p155
      %p158 = scmp.ne.s32.totalorder %s141, %s157
      %p159 = scmp.eq.s32.totalorder %s23, 0
      %p160 = por %p158, %p159
      %p161 = scmp.le.s32.totalorder 1, %s17
      %p162 = scmp.lt.s32.totalorder %s17, 3
      %p163 = pnand %p161, %p162
      %p164 = pneg %p163
      // Predicated region
      $region9: #{tpu_custom_call.1} parent=5 // pred_check
        _
      $region10: #{tpu_custom_call.1} parent=5 // pred_check_branch
        %166 = sbr.rel (%p163) target = $region12
      $region11: #{tpu_custom_call.1} parent=5 // pred_region
        %s167 = ssub.s32 %s17, 1
        // Predicated region
        $region13: #{tpu_custom_call.1} parent=11 // pred_check
          %p168 = pneg %p38
        $region14: #{tpu_custom_call.1} parent=11 // pred_check_branch
          %170 = sbr.rel (%p168) target = $region16
        $region15: #{tpu_custom_call.1} parent=11 // pred_region
          _
        $region16: #{tpu_custom_call.1} parent=11 // pred_fallthru
          _
        // Predicated region
        $region17: #{tpu_custom_call.1} parent=11 // pred_check
          %p171 = pneg %p59
        $region18: #{tpu_custom_call.1} parent=11 // pred_check_branch
          %173 = sbr.rel (%p171) target = $region20
        $region19: #{tpu_custom_call.1} parent=11 // pred_region
          _
        $region20: #{tpu_custom_call.1} parent=11 // pred_fallthru
          _
        // Predicated region
        $region21: #{tpu_custom_call.1} parent=11 // pred_check
          %p174 = pneg %p80
        $region22: #{tpu_custom_call.1} parent=11 // pred_check_branch
          %176 = sbr.rel (%p174) target = $region24
        $region23: #{tpu_custom_call.1} parent=11 // pred_region
          _
        $region24: #{tpu_custom_call.1} parent=11 // pred_fallthru
          _
        // Predicated region
        $region25: #{tpu_custom_call.1} parent=11 // pred_check
          %p177 = pneg %p101
        $region26: #{tpu_custom_call.1} parent=11 // pred_check_branch
          %179 = sbr.rel (%p177) target = $region28
        $region27: #{tpu_custom_call.1} parent=11 // pred_region
          _
        $region28: #{tpu_custom_call.1} parent=11 // pred_fallthru
          _
      $region12: #{tpu_custom_call.1} parent=5 // pred_fallthru
        _
      %p180 = scmp.lt.s32.totalorder %s17, 2
      // Predicated region
      $region29: #{tpu_custom_call.1} parent=5 // pred_check
        %p181 = pneg %p180
      $region30: #{tpu_custom_call.1} parent=5 // pred_check_branch
        %183 = sbr.rel (%p181) target = $region32
      $region31: #{tpu_custom_call.1} parent=5 // pred_region
        // Predicated region
        $region33: #{tpu_custom_call.1} parent=31 // pred_check
          %p184 = pneg %p121
        $region34: #{tpu_custom_call.1} parent=31 // pred_check_branch
          %186 = sbr.rel (%p184) target = $region36
        $region35: #{tpu_custom_call.1} parent=31 // pred_region
          %s187 = sand.u32 %s111, 1
          %s188 = scalar_lea.sflag [#allocation3], %s187
          %s189 = sand.u32 %s111, 1
          %s190 = smul.addr %s189, 64
          %s191 = scalar_lea.vmem [#allocation2], %s190
          %193 = vsyncadd %s188, 0
          %s194 = smul.addr %s17, 8
          %s195 = smul.addr %s194, 8
          %s196 = scalar_lea.hbm %s4, %s195
          %s197 = sshll.u32 %s196, 4
          %s198 = int_to_ptr.hbm [resolvable:$true] %s197
          %s199 = sshll.u32 %s191, 4
          %s200 = int_to_ptr.vmem [resolvable:$true] %s199
          %205 = dma.hbm_to_vmem [thread:$0]  %s198, 1024, %s200, %s188, 256, 256, 16
        $region36: #{tpu_custom_call.1} parent=31 // pred_fallthru
          _
      $region32: #{tpu_custom_call.1} parent=5 // pred_fallthru
        _
      %p206 = scmp.le.s32.totalorder 1, %s17
      %p207 = scmp.lt.s32.totalorder %s17, 3
      %p208 = pnand %p206, %p207
      %p209 = pneg %p208
      // Predicated region
      $region37: #{tpu_custom_call.1} parent=5 // pred_check
        _
      $region38: #{tpu_custom_call.1} parent=5 // pred_check_branch
        %211 = sbr.rel (%p208) target = $region40
      $region39: #{tpu_custom_call.1} parent=5 // pred_region
        %s212 = ssub.s32 %s17, 1
        %s213 = sand.u32 %s114, 1
        %s214 = scalar_lea.sflag [#allocation3], %s213
        %s215 = sand.u32 %s114, 1
        %s216 = smul.addr %s215, 64
        %s217 = scalar_lea.vmem [#allocation2], %s216
        // Predicated region
        $region41: #{tpu_custom_call.1} parent=39 // pred_check
          %p218 = pneg %p127
        $region42: #{tpu_custom_call.1} parent=39 // pred_check_branch
          %220 = sbr.rel (%p218) target = $region44
        $region43: #{tpu_custom_call.1} parent=39 // pred_region
          %222 = dma.done %s214, 1024
        $region44: #{tpu_custom_call.1} parent=39 // pred_fallthru
          _
        %p223 = pneg %p38
        %p224 = pneg %p35
        %p225 = pneg %p59
        %p226 = pneg %p56
        %p227 = pneg %p80
        %p228 = pneg %p77
        %p229 = pneg %p101
        %p230 = pneg %p98
        %s231 = sand.u32 %s114, 1
        %s232 = scalar_lea.sflag [#allocation3], %s231
        %s233 = sand.u32 %s114, 1
        %s234 = smul.addr %s233, 64
        %s235 = scalar_lea.vmem [#allocation2], %s234
        %p236 = pneg %p127
        %p237 = pneg %p124
        %p238 = pneg %p153
        %p239 = pneg %p150
        %s240 = sand.u32 %s140, 1
        %s241 = scalar_lea.sflag [#allocation4], %s240
        %s242 = sand.u32 %s140, 1
        %s243 = smul.addr %s242, 64
        %s244 = scalar_lea.vmem [#allocation5], %s243
        %v245 = vld [vmem:[%s217] sm:$0xff]
        %v246 = vld [vmem:[%s217 + $0x8] sm:$0xff]
        %v247 = vld [vmem:[%s217 + $0x10] sm:$0xff]
        %v248 = vld [vmem:[%s217 + $0x18] sm:$0xff]
        %v249 = vld [vmem:[%s217 + $0x20] sm:$0xff]
        %v250 = vld [vmem:[%s217 + $0x28] sm:$0xff]
        %v251 = vld [vmem:[%s217 + $0x30] sm:$0xff]
        %v252 = vld [vmem:[%s217 + $0x38] sm:$0xff]
        %v253 = vadd.f32 %v245, %v246
        %254 = vadd.xlane.f32.xlu0 %v253
        %v255 = vpop.xlane.xlu0 %254
        %v256 = vadd.f32 %v247, %v248
        %257 = vadd.xlane.f32.xlu0 %v256
        %v258 = vpop.xlane.xlu0 %257
        %v259 = vadd.f32 %v249, %v250
        %260 = vadd.xlane.f32.xlu0 %v259
        %v261 = vpop.xlane.xlu0 %260
        %v262 = vadd.f32 %v251, %v252
        %263 = vadd.xlane.f32.xlu0 %v262
        %v264 = vpop.xlane.xlu0 %263
        %v265 = vrcp.pop 256.0
        %v266 = vmul.f32 256.0, %v265
        %v267 = vsub.f32 1.0, %v266
        %v268 = vmul.f32 %v265, %v267
        %v269 = vadd.f32 %v265, %v268
        %vm270 = vweird.f32 %v265
        %v271 = vsel %vm270, %v265, %v269
        %v272 = vmul.f32 %v255, %v271
        %v273 = vmul.f32 %v258, %v271
        %v274 = vmul.f32 %v261, %v271
        %v275 = vmul.f32 %v264, %v271
        %v276 = vmax.f32 %v245, %v246
        %277 = vmax.xlane.f32.xlu0 %v276
        %v278 = vpop.xlane.xlu0 %277
        %v279 = vmax.f32 %v247, %v248
        %280 = vmax.xlane.f32.xlu0 %v279
        %v281 = vpop.xlane.xlu0 %280
        %v282 = vmax.f32 %v249, %v250
        %283 = vmax.xlane.f32.xlu0 %v282
        %v284 = vpop.xlane.xlu0 %283
        %v285 = vmax.f32 %v251, %v252
        %286 = vmax.xlane.f32.xlu0 %v285
        %v287 = vpop.xlane.xlu0 %286
        %v292 = vlaneseq
        %v293 = vand.u32 %v292, 127
        %v294 = vperm.slane %v272, %v293
        %v295 = vadd.s32 %v293, 4294967288
        %v296 = vperm.slane %v273, %v295
        %vm297 = vcmask 130112
        %v298 = vsel %vm297, %v296, %v294
        %v299 = vadd.s32 %v293, 4294967280
        %v300 = vperm.slane %v274, %v299
        %vm301 = vcmask 195712
        %v302 = vsel %vm301, %v300, %v298
        %v303 = vadd.s32 %v293, 4294967272
        %v304 = vperm.slane %v275, %v303
        %vm305 = vcmask 261312
        %v306 = vsel %vm305, %v304, %v302
        %v312 = vperm.slane %v278, %v293
        %v313 = vperm.slane %v281, %v295
        %v314 = vsel %vm297, %v313, %v312
        %v315 = vperm.slane %v284, %v299
        %v316 = vsel %vm301, %v315, %v314
        %v317 = vperm.slane %v287, %v303
        %v318 = vsel %vm305, %v317, %v316
        %vm320 = vcmask 1040384
        %v321 = vsel %vm320, %v306, %v318
        %v322 = vld [vmem:[%s0] sm:$0xff]
        %v323 = vld [vmem:[%s0 + $0x8] sm:$0xff]
        %v324 = vld [vmem:[%s0 + $0x10] sm:$0xff]
        %v325 = vld [vmem:[%s0 + $0x18] sm:$0xff]
        %v326 = vld [vmem:[%s1] sm:$0x1]
        %v328 = vperm.slane %v326, 0
        %vm330 = vcmask 261120
        %v332 = vsel %vm330, %v321, 0
        %334 = vmatpush.msra.mxu0 0.0
        %335 = vmatpush.msra.mxu0 0.0
        %336 = vmatpush.msra.mxu0 0.0
        %337 = vmatpush.msra.mxu0 0.0
        %338 = vmatpush.msra.mxu0 0.0
        %339 = vmatpush.msra.mxu0 0.0
        %340 = vmatpush.msra.mxu0 0.0
        %341 = vmatpush.msra.mxu0 0.0
        %342 = vmatpush.msra.mxu0 0.0
        %343 = vmatpush.msra.mxu0 0.0
        %344 = vmatpush.msra.mxu0 0.0
        %345 = vmatpush.msra.mxu0 0.0
        %v346 = vand.u32 %v325, 4294901760
        %347 = vmatpush.msra.mxu0 %v346
        %v348 = vand.u32 %v324, 4294901760
        %349 = vmatpush.msra.mxu0 %v348
        %v350 = vand.u32 %v323, 4294901760
        %351 = vmatpush.msra.mxu0 %v350
        %v352 = vand.u32 %v322, 4294901760
        %353 = vmatpush.msra.mxu0 %v352
        %v354 = vand.u32 %v332, 4294901760
        %v355 = vsub.f32 %v332, %v354
        %v356 = vand.u32 %v355, 4294901760
        %v357 = vsub.f32 %v355, %v356
        %v358 = vand.u32 %v357, 4294901760
        %359 = vmatmul.f32.gmra.mxu0 %v358
        %v360 = vpop.f32.mrf.mxu0
        %v361 = vadd.f32 %v328, %v360
        %362 = vdwg.mxu0
        %363 = vmatpush.msra.mxu0 0.0
        %364 = vmatpush.msra.mxu0 0.0
        %365 = vmatpush.msra.mxu0 0.0
        %366 = vmatpush.msra.mxu0 0.0
        %367 = vmatpush.msra.mxu0 0.0
        %368 = vmatpush.msra.mxu0 0.0
        %369 = vmatpush.msra.mxu0 0.0
        %370 = vmatpush.msra.mxu0 0.0
        %371 = vmatpush.msra.mxu0 0.0
        %372 = vmatpush.msra.mxu0 0.0
        %373 = vmatpush.msra.mxu0 0.0
        %374 = vmatpush.msra.mxu0 0.0
        %v375 = vand.u32 %v325, 4294901760
        %v376 = vsub.f32 %v325, %v375
        %v377 = vand.u32 %v376, 4294901760
        %v378 = vsub.f32 %v376, %v377
        %v379 = vand.u32 %v378, 4294901760
        %380 = vmatpush.msra.mxu0 %v379
        %v381 = vand.u32 %v324, 4294901760
        %v382 = vsub.f32 %v324, %v381
        %v383 = vand.u32 %v382, 4294901760
        %v384 = vsub.f32 %v382, %v383
        %v385 = vand.u32 %v384, 4294901760
        %386 = vmatpush.msra.mxu0 %v385
        %v387 = vand.u32 %v323, 4294901760
        %v388 = vsub.f32 %v323, %v387
        %v389 = vand.u32 %v388, 4294901760
        %v390 = vsub.f32 %v388, %v389
        %v391 = vand.u32 %v390, 4294901760
        %392 = vmatpush.msra.mxu0 %v391
        %v393 = vand.u32 %v322, 4294901760
        %v394 = vsub.f32 %v322, %v393
        %v395 = vand.u32 %v394, 4294901760
        %v396 = vsub.f32 %v394, %v395
        %v397 = vand.u32 %v396, 4294901760
        %398 = vmatpush.msra.mxu0 %v397
        %v399 = vand.u32 %v332, 4294901760
        %400 = vmatmul.f32.gmra.mxu0 %v399
        %v401 = vpop.f32.mrf.mxu0
        %v402 = vadd.f32 %v361, %v401
        %403 = vdwg.mxu0
        %404 = vmatpush.msra.mxu0 0.0
        %405 = vmatpush.msra.mxu0 0.0
        %406 = vmatpush.msra.mxu0 0.0
        %407 = vmatpush.msra.mxu0 0.0
        %408 = vmatpush.msra.mxu0 0.0
        %409 = vmatpush.msra.mxu0 0.0
        %410 = vmatpush.msra.mxu0 0.0
        %411 = vmatpush.msra.mxu0 0.0
        %412 = vmatpush.msra.mxu0 0.0
        %413 = vmatpush.msra.mxu0 0.0
        %414 = vmatpush.msra.mxu0 0.0
        %415 = vmatpush.msra.mxu0 0.0
        %v416 = vand.u32 %v325, 4294901760
        %v417 = vsub.f32 %v325, %v416
        %418 = vmatpush.msra.mxu0 %v417
        %v419 = vand.u32 %v324, 4294901760
        %v420 = vsub.f32 %v324, %v419
        %421 = vmatpush.msra.mxu0 %v420
        %v422 = vand.u32 %v323, 4294901760
        %v423 = vsub.f32 %v323, %v422
        %424 = vmatpush.msra.mxu0 %v423
        %v425 = vand.u32 %v322, 4294901760
        %v426 = vsub.f32 %v322, %v425
        %427 = vmatpush.msra.mxu0 %v426
        %v428 = vand.u32 %v332, 4294901760
        %v429 = vsub.f32 %v332, %v428
        %430 = vmatmul.f32.gmra.mxu0 %v429
        %v431 = vpop.f32.mrf.mxu0
        %v432 = vadd.f32 %v402, %v431
        %433 = vdwg.mxu0
        %434 = vmatpush.msra.mxu0 0.0
        %435 = vmatpush.msra.mxu0 0.0
        %436 = vmatpush.msra.mxu0 0.0
        %437 = vmatpush.msra.mxu0 0.0
        %438 = vmatpush.msra.mxu0 0.0
        %439 = vmatpush.msra.mxu0 0.0
        %440 = vmatpush.msra.mxu0 0.0
        %441 = vmatpush.msra.mxu0 0.0
        %442 = vmatpush.msra.mxu0 0.0
        %443 = vmatpush.msra.mxu0 0.0
        %444 = vmatpush.msra.mxu0 0.0
        %445 = vmatpush.msra.mxu0 0.0
        %v446 = vand.u32 %v325, 4294901760
        %447 = vmatpush.msra.mxu0 %v446
        %v448 = vand.u32 %v324, 4294901760
        %449 = vmatpush.msra.mxu0 %v448
        %v450 = vand.u32 %v323, 4294901760
        %451 = vmatpush.msra.mxu0 %v450
        %v452 = vand.u32 %v322, 4294901760
        %453 = vmatpush.msra.mxu0 %v452
        %v454 = vand.u32 %v332, 4294901760
        %v455 = vsub.f32 %v332, %v454
        %v456 = vand.u32 %v455, 4294901760
        %457 = vmatmul.f32.gmra.mxu0 %v456
        %v458 = vpop.f32.mrf.mxu0
        %v459 = vadd.f32 %v432, %v458
        %460 = vdwg.mxu0
        %461 = vmatpush.msra.mxu0 0.0
        %462 = vmatpush.msra.mxu0 0.0
        %463 = vmatpush.msra.mxu0 0.0
        %464 = vmatpush.msra.mxu0 0.0
        %465 = vmatpush.msra.mxu0 0.0
        %466 = vmatpush.msra.mxu0 0.0
        %467 = vmatpush.msra.mxu0 0.0
        %468 = vmatpush.msra.mxu0 0.0
        %469 = vmatpush.msra.mxu0 0.0
        %470 = vmatpush.msra.mxu0 0.0
        %471 = vmatpush.msra.mxu0 0.0
        %472 = vmatpush.msra.mxu0 0.0
        %v473 = vand.u32 %v325, 4294901760
        %v474 = vsub.f32 %v325, %v473
        %v475 = vand.u32 %v474, 4294901760
        %476 = vmatpush.msra.mxu0 %v475
        %v477 = vand.u32 %v324, 4294901760
        %v478 = vsub.f32 %v324, %v477
        %v479 = vand.u32 %v478, 4294901760
        %480 = vmatpush.msra.mxu0 %v479
        %v481 = vand.u32 %v323, 4294901760
        %v482 = vsub.f32 %v323, %v481
        %v483 = vand.u32 %v482, 4294901760
        %484 = vmatpush.msra.mxu0 %v483
        %v485 = vand.u32 %v322, 4294901760
        %v486 = vsub.f32 %v322, %v485
        %v487 = vand.u32 %v486, 4294901760
        %488 = vmatpush.msra.mxu0 %v487
        %v489 = vand.u32 %v332, 4294901760
        %490 = vmatmul.f32.gmra.mxu0 %v489
        %v491 = vpop.f32.mrf.mxu0
        %v492 = vadd.f32 %v459, %v491
        %493 = vdwg.mxu0
        %494 = vmatpush.msra.mxu0 0.0
        %495 = vmatpush.msra.mxu0 0.0
        %496 = vmatpush.msra.mxu0 0.0
        %497 = vmatpush.msra.mxu0 0.0
        %498 = vmatpush.msra.mxu0 0.0
        %499 = vmatpush.msra.mxu0 0.0
        %500 = vmatpush.msra.mxu0 0.0
        %501 = vmatpush.msra.mxu0 0.0
        %502 = vmatpush.msra.mxu0 0.0
        %503 = vmatpush.msra.mxu0 0.0
        %504 = vmatpush.msra.mxu0 0.0
        %505 = vmatpush.msra.mxu0 0.0
        %v506 = vand.u32 %v325, 4294901760
        %507 = vmatpush.msra.mxu0 %v506
        %v508 = vand.u32 %v324, 4294901760
        %509 = vmatpush.msra.mxu0 %v508
        %v510 = vand.u32 %v323, 4294901760
        %511 = vmatpush.msra.mxu0 %v510
        %v512 = vand.u32 %v322, 4294901760
        %513 = vmatpush.msra.mxu0 %v512
        %v514 = vand.u32 %v332, 4294901760
        %515 = vmatmul.f32.gmra.mxu0 %v514
        %v516 = vpop.f32.mrf.mxu0
        %v517 = vadd.f32 %v492, %v516
        %518 = vdwg.mxu0
        %v519 = vmax.f32 %v517, 0.0
        %v520 = vld [vmem:[%s2] sm:$0xff]
        %v521 = vld [vmem:[%s3] sm:$0x1]
        %v523 = vperm.slane %v521, 0
        %vm525 = vcmask 64512
        %v527 = vsel %vm525, %v519, 0
        %529 = vmatpush.msra.mxu0 0.0
        %530 = vmatpush.msra.mxu0 0.0
        %531 = vmatpush.msra.mxu0 0.0
        %532 = vmatpush.msra.mxu0 0.0
        %533 = vmatpush.msra.mxu0 0.0
        %534 = vmatpush.msra.mxu0 0.0
        %535 = vmatpush.msra.mxu0 0.0
        %536 = vmatpush.msra.mxu0 0.0
        %537 = vmatpush.msra.mxu0 0.0
        %538 = vmatpush.msra.mxu0 0.0
        %539 = vmatpush.msra.mxu0 0.0
        %540 = vmatpush.msra.mxu0 0.0
        %541 = vmatpush.msra.mxu0 0.0
        %542 = vmatpush.msra.mxu0 0.0
        %543 = vmatpush.msra.mxu0 0.0
        %v544 = vand.u32 %v520, 4294901760
        %545 = vmatpush.msra.mxu0 %v544
        %v546 = vand.u32 %v527, 4294901760
        %v547 = vsub.f32 %v527, %v546
        %v548 = vand.u32 %v547, 4294901760
        %v549 = vsub.f32 %v547, %v548
        %v550 = vand.u32 %v549, 4294901760
        %551 = vmatmul.f32.gmra.mxu0 %v550
        %v552 = vpop.f32.mrf.mxu0
        %v553 = vadd.f32 %v523, %v552
        %554 = vdwg.mxu0
        %555 = vmatpush.msra.mxu0 0.0
        %556 = vmatpush.msra.mxu0 0.0
        %557 = vmatpush.msra.mxu0 0.0
        %558 = vmatpush.msra.mxu0 0.0
        %559 = vmatpush.msra.mxu0 0.0
        %560 = vmatpush.msra.mxu0 0.0
        %561 = vmatpush.msra.mxu0 0.0
        %562 = vmatpush.msra.mxu0 0.0
        %563 = vmatpush.msra.mxu0 0.0
        %564 = vmatpush.msra.mxu0 0.0
        %565 = vmatpush.msra.mxu0 0.0
        %566 = vmatpush.msra.mxu0 0.0
        %567 = vmatpush.msra.mxu0 0.0
        %568 = vmatpush.msra.mxu0 0.0
        %569 = vmatpush.msra.mxu0 0.0
        %v570 = vand.u32 %v520, 4294901760
        %v571 = vsub.f32 %v520, %v570
        %v572 = vand.u32 %v571, 4294901760
        %v573 = vsub.f32 %v571, %v572
        %v574 = vand.u32 %v573, 4294901760
        %575 = vmatpush.msra.mxu0 %v574
        %v576 = vand.u32 %v527, 4294901760
        %577 = vmatmul.f32.gmra.mxu0 %v576
        %v578 = vpop.f32.mrf.mxu0
        %v579 = vadd.f32 %v553, %v578
        %580 = vdwg.mxu0
        %581 = vmatpush.msra.mxu0 0.0
        %582 = vmatpush.msra.mxu0 0.0
        %583 = vmatpush.msra.mxu0 0.0
        %584 = vmatpush.msra.mxu0 0.0
        %585 = vmatpush.msra.mxu0 0.0
        %586 = vmatpush.msra.mxu0 0.0
        %587 = vmatpush.msra.mxu0 0.0
        %588 = vmatpush.msra.mxu0 0.0
        %589 = vmatpush.msra.mxu0 0.0
        %590 = vmatpush.msra.mxu0 0.0
        %591 = vmatpush.msra.mxu0 0.0
        %592 = vmatpush.msra.mxu0 0.0
        %593 = vmatpush.msra.mxu0 0.0
        %594 = vmatpush.msra.mxu0 0.0
        %595 = vmatpush.msra.mxu0 0.0
        %v596 = vand.u32 %v520, 4294901760
        %v597 = vsub.f32 %v520, %v596
        %598 = vmatpush.msra.mxu0 %v597
        %v599 = vand.u32 %v527, 4294901760
        %v600 = vsub.f32 %v527, %v599
        %601 = vmatmul.f32.gmra.mxu0 %v600
        %v602 = vpop.f32.mrf.mxu0
        %v603 = vadd.f32 %v579, %v602
        %604 = vdwg.mxu0
        %605 = vmatpush.msra.mxu0 0.0
        %606 = vmatpush.msra.mxu0 0.0
        %607 = vmatpush.msra.mxu0 0.0
        %608 = vmatpush.msra.mxu0 0.0
        %609 = vmatpush.msra.mxu0 0.0
        %610 = vmatpush.msra.mxu0 0.0
        %611 = vmatpush.msra.mxu0 0.0
        %612 = vmatpush.msra.mxu0 0.0
        %613 = vmatpush.msra.mxu0 0.0
        %614 = vmatpush.msra.mxu0 0.0
        %615 = vmatpush.msra.mxu0 0.0
        %616 = vmatpush.msra.mxu0 0.0
        %617 = vmatpush.msra.mxu0 0.0
        %618 = vmatpush.msra.mxu0 0.0
        %619 = vmatpush.msra.mxu0 0.0
        %v620 = vand.u32 %v520, 4294901760
        %621 = vmatpush.msra.mxu0 %v620
        %v622 = vand.u32 %v527, 4294901760
        %v623 = vsub.f32 %v527, %v622
        %v624 = vand.u32 %v623, 4294901760
        %625 = vmatmul.f32.gmra.mxu0 %v624
        %v626 = vpop.f32.mrf.mxu0
        %v627 = vadd.f32 %v603, %v626
        %628 = vdwg.mxu0
        %629 = vmatpush.msra.mxu0 0.0
        %630 = vmatpush.msra.mxu0 0.0
        %631 = vmatpush.msra.mxu0 0.0
        %632 = vmatpush.msra.mxu0 0.0
        %633 = vmatpush.msra.mxu0 0.0
        %634 = vmatpush.msra.mxu0 0.0
        %635 = vmatpush.msra.mxu0 0.0
        %636 = vmatpush.msra.mxu0 0.0
        %637 = vmatpush.msra.mxu0 0.0
        %638 = vmatpush.msra.mxu0 0.0
        %639 = vmatpush.msra.mxu0 0.0
        %640 = vmatpush.msra.mxu0 0.0
        %641 = vmatpush.msra.mxu0 0.0
        %642 = vmatpush.msra.mxu0 0.0
        %643 = vmatpush.msra.mxu0 0.0
        %v644 = vand.u32 %v520, 4294901760
        %v645 = vsub.f32 %v520, %v644
        %v646 = vand.u32 %v645, 4294901760
        %647 = vmatpush.msra.mxu0 %v646
        %v648 = vand.u32 %v527, 4294901760
        %649 = vmatmul.f32.gmra.mxu0 %v648
        %v650 = vpop.f32.mrf.mxu0
        %v651 = vadd.f32 %v627, %v650
        %652 = vdwg.mxu0
        %653 = vmatpush.msra.mxu0 0.0
        %654 = vmatpush.msra.mxu0 0.0
        %655 = vmatpush.msra.mxu0 0.0
        %656 = vmatpush.msra.mxu0 0.0
        %657 = vmatpush.msra.mxu0 0.0
        %658 = vmatpush.msra.mxu0 0.0
        %659 = vmatpush.msra.mxu0 0.0
        %660 = vmatpush.msra.mxu0 0.0
        %661 = vmatpush.msra.mxu0 0.0
        %662 = vmatpush.msra.mxu0 0.0
        %663 = vmatpush.msra.mxu0 0.0
        %664 = vmatpush.msra.mxu0 0.0
        %665 = vmatpush.msra.mxu0 0.0
        %666 = vmatpush.msra.mxu0 0.0
        %667 = vmatpush.msra.mxu0 0.0
        %v668 = vand.u32 %v520, 4294901760
        %669 = vmatpush.msra.mxu0 %v668
        %v670 = vand.u32 %v527, 4294901760
        %671 = vmatmul.f32.gmra.mxu0 %v670
        %v672 = vpop.f32.mrf.mxu0
        %v673 = vadd.f32 %v651, %v672
        %674 = vdwg.mxu0
        %v676 = vrot.slane %v673, 1
        %v678 = vadd.f32 %v673, %v676
        %v679 = vxor.u32 %v678, 2147483648
        %v680 = vmul.f32 %v679, 1.442695
        %v681 = vpow.pop %v680
        %v682 = vadd.f32 %v681, 1.0
        %v683 = vrcp.pop %v682
        %v684 = vmul.f32 %v682, %v683
        %v685 = vsub.f32 1.0, %v684
        %v686 = vmul.f32 %v683, %v685
        %v687 = vadd.f32 %v683, %v686
        %vm688 = vweird.f32 %v682
        %vm689 = vweird.f32 %v683
        %vm690 = vmor %vm688, %vm689
        %v691 = vsel %vm690, %v683, %v687
        %v692 = vand.u32 2147483647, %v682
        %vm693 = vcmp.eq.f32.partialorder %v692, 8.507059e+37
        %v694 = vand.u32 %v682, 2147483648
        %v695 = vor.u32 1.1754944e-38, %v694
        %v696 = vsel %vm693, %v695, %v691
        %v697 = vmul.f32 1.0, %v696
        %v698 = vperm.slane %v697, 0
        %v699 = vlaneseq
        %v700 = vshrl.u32 %v699, 7
        %702 = vset.pattern.permute.xlu0 %v700
        %703 = vperm.xlu0 %702, %v698
        %v704 = vpop.permute.xlu0 %703
        %v705 = vlaneseq
        %v706 = vshrl.u32 %v705, 7
        %v707 = vadd.s32 %v706, 8
        %708 = vset.pattern.permute.xlu0 %v707
        %709 = vperm.xlu0 %708, %v698
        %v710 = vpop.permute.xlu0 %709
        %v711 = vlaneseq
        %v712 = vshrl.u32 %v711, 7
        %v713 = vadd.s32 %v712, 16
        %714 = vset.pattern.permute.xlu0 %v713
        %715 = vperm.xlu0 %714, %v698
        %v716 = vpop.permute.xlu0 %715
        %v717 = vlaneseq
        %v718 = vshrl.u32 %v717, 7
        %v719 = vadd.s32 %v718, 24
        %720 = vset.pattern.permute.xlu0 %v719
        %721 = vperm.xlu0 %720, %v698
        %v722 = vpop.permute.xlu0 %721
        %v723 = vmul.f32 %v245, %v704
        %v724 = vmul.f32 %v246, %v704
        %v725 = vmul.f32 %v247, %v710
        %v726 = vmul.f32 %v248, %v710
        %v727 = vmul.f32 %v249, %v716
        %v728 = vmul.f32 %v250, %v716
        %v729 = vmul.f32 %v251, %v722
        %v730 = vmul.f32 %v252, %v722
        %731 = vst [vmem:[%s244] sm:$0xff] %v723
        %732 = vst [vmem:[%s244 + $0x8] sm:$0xff] %v724
        %733 = vst [vmem:[%s244 + $0x10] sm:$0xff] %v725
        %734 = vst [vmem:[%s244 + $0x18] sm:$0xff] %v726
        %735 = vst [vmem:[%s244 + $0x20] sm:$0xff] %v727
        %736 = vst [vmem:[%s244 + $0x28] sm:$0xff] %v728
        %737 = vst [vmem:[%s244 + $0x30] sm:$0xff] %v729
        %738 = vst [vmem:[%s244 + $0x38] sm:$0xff] %v730
        %s739 = sand.u32 %s140, 1
        %s740 = scalar_lea.sflag [#allocation4], %s739
        %s741 = sand.u32 %s140, 1
        %s742 = smul.addr %s741, 64
        %s743 = scalar_lea.vmem [#allocation5], %s742
        // Predicated region
        $region45: #{tpu_custom_call.1} parent=39 // pred_check
          %p744 = pneg %p150
        $region46: #{tpu_custom_call.1} parent=39 // pred_check_branch
          %746 = sbr.rel (%p744) target = $region48
        $region47: #{tpu_custom_call.1} parent=39 // pred_region
          %748 = vsyncadd %s740, 0
          %s749 = smul.addr %s22, 8
          %s750 = smul.addr %s749, 8
          %s751 = scalar_lea.hbm %s5, %s750
          %s752 = sshll.u32 %s743, 4
          %s753 = int_to_ptr.vmem [resolvable:$true] %s752
          %s754 = sshll.u32 %s751, 4
          %s755 = int_to_ptr.hbm [resolvable:$true] %s754
          %760 = dma.vmem_to_hbm [thread:$0]  %s753, 1024, %s755, %s740, 256, 256, 16
        $region48: #{tpu_custom_call.1} parent=39 // pred_fallthru
          _
      $region40: #{tpu_custom_call.1} parent=5 // pred_fallthru
        _
      %p761 = scmp.le.s32.totalorder 2, %s17
      // Predicated region
      $region49: #{tpu_custom_call.1} parent=5 // pred_check
        %p762 = pneg %p761
      $region50: #{tpu_custom_call.1} parent=5 // pred_check_branch
        %764 = sbr.rel (%p762) target = $region52
      $region51: #{tpu_custom_call.1} parent=5 // pred_region
        %s765 = ssub.s32 %s17, 2
        // Predicated region
        $region53: #{tpu_custom_call.1} parent=51 // pred_check
          %p766 = pneg %p156
        $region54: #{tpu_custom_call.1} parent=51 // pred_check_branch
          %768 = sbr.rel (%p766) target = $region56
        $region55: #{tpu_custom_call.1} parent=51 // pred_region
          %s769 = sand.u32 %s141, 1
          %s770 = scalar_lea.sflag [#allocation4], %s769
          %s771 = sand.u32 %s141, 1
          %s772 = smul.addr %s771, 64
          %s773 = scalar_lea.vmem [#allocation5], %s772
          %775 = dma.done %s770, 1024
        $region56: #{tpu_custom_call.1} parent=51 // pred_fallthru
          _
      $region52: #{tpu_custom_call.1} parent=5 // pred_fallthru
        _
    $region6: #{tpu_custom_call.1} parent=1 // loop_footer
      %s21 = sadd.s32 1, %s17
    $region7: #{tpu_custom_call.1} parent=1 // loop_footer_branch
      %16 = sbr.rel target = $region3
    $region8: #{tpu_custom_call.1} parent=1 // loop_exit
      _
    %776 = vsyncpa [#allocation3], 1
    %s777 = scalar_lea.sflag [#allocation3], 1
    %778 = vsyncpa %s777, 1
    %779 = vsyncpa [#allocation4], 1
    %s780 = scalar_lea.sflag [#allocation4], 1
    %781 = vsyncpa %s780, 1

</llo_original>
